<compile_context>
chip_gen: v7x
topology: tpu7x:2x2x1
jax: 0.10.0
libtpu: 0.0.40
codegen_flags: <defaults>
</compile_context>

<pallas_src>
import jax
import jax.numpy as jnp
from jax.experimental import pallas as pl
from jax.experimental.pallas import tpu as pltpu


def _round_up(x, m):
    return ((x + m - 1) // m) * m


_SINGLE_STEP_MAX_ROWS = 512   # below this, one grid step (grid is a serial loop
                              # on v5e/v6e; per-step overhead ~0.35 us)
_VMEM_DATA_BUDGET = 48 << 20  # conservative (v7x physical VMEM is 64 MiB)


def _auto_tile_b(B, row_bytes, weights_bytes):
    """Rows of x/out processed per grid step."""
    def fits(tile):
        # double-buffered x tile + out tile, plus resident weights
        return weights_bytes + 2 * tile * row_bytes <= _VMEM_DATA_BUDGET

    if B <= _SINGLE_STEP_MAX_ROWS and fits(B):
        return B                       # single step; block == full batch dim
    # Large batch: split so each step carries enough work to beat the step
    # overhead (and each v7x TC gets a meaningful chunk); 16-row aligned.
    tile = min(1024, max(256, _round_up(pl.cdiv(B, 2), 16)))
    while tile > 16 and not fits(tile):
        tile = _round_up(tile // 2, 16)
    return min(tile, B)


def decoder_kernel(x_ref, w1_ref, b1_ref, w2_ref, b2_ref, out_ref):
    # x_ref  : (TB, L)    input tile (any float dtype; cast to bf16 here)
    # w1_ref : (L, Hp)    bf16 FC_hidden weight (in x out, lane-padded)
    # b1_ref : (1, Hp)    f32  FC_hidden bias
    # w2_ref : (Hp, Op)   bf16 FC_output weight (in x out, lane-padded)
    # b2_ref : (1, Op)    f32  FC_output bias
    # out_ref: (TB, Op)   output tile
    x = x_ref[...].astype(w1_ref.dtype)                       # bf16 MXU operand
    h = jnp.dot(x, w1_ref[...], preferred_element_type=jnp.float32)
    h = jnp.maximum(h + b1_ref[...], 0.0)                     # relu in f32
    y = jnp.dot(h.astype(w2_ref.dtype), w2_ref[...],
                preferred_element_type=jnp.float32)
    out_ref[...] = jax.nn.sigmoid(y + b2_ref[...]).astype(out_ref.dtype)


def prepare_decoder_params(w_hidden, b_hidden, w_output, b_output):
    """One-time re-layout of PyTorch-layout Linear params (call at model init).

    w_hidden: (H, L), b_hidden: (H,), w_output: (O, H), b_output: (O,)
    Zero-padding is mathematically inert: relu(0 + 0) = 0 and the zero rows of
    w2 contribute nothing; padded output columns (sigmoid(0) = 0.5) are sliced
    off in decoder_forward only when O is not lane-aligned.
    """
    H, L = w_hidden.shape
    O = w_output.shape[0]
    H_pad = _round_up(H, 128)          # lane-dense intermediate h
    O_pad = _round_up(O, 128)          # lane-dense output stores
    f32, bf16 = jnp.float32, jnp.bfloat16

    w1 = jnp.zeros((L, H_pad), bf16).at[:, :H].set(
        jnp.asarray(w_hidden, f32).T.astype(bf16))
    b1 = jnp.zeros((1, H_pad), f32).at[:, :H].set(
        jnp.asarray(b_hidden, f32)[None, :])
    w2 = jnp.zeros((H_pad, O_pad), bf16).at[:H, :O].set(
        jnp.asarray(w_output, f32).T.astype(bf16))
    b2 = jnp.zeros((1, O_pad), f32).at[:, :O].set(
        jnp.asarray(b_output, f32)[None, :])
    return dict(w1=w1, b1=b1, w2=w2, b2=b2,
                latent_dim=L, hidden_dim=H, output_dim=O)


def decoder_forward(x, params, *, tile_b=None, out_dtype=jnp.float32):
    """x: (B, latent_dim). `params` from prepare_decoder_params."""
    w1, b1, w2, b2 = params["w1"], params["b1"], params["w2"], params["b2"]
    B, L = x.shape
    assert L == params["latent_dim"], "latent_dim mismatch"
    O = params["output_dim"]
    H_pad = w1.shape[1]
    O_pad = w2.shape[1]

    out_itemsize = jnp.dtype(out_dtype).itemsize
    row_bytes = L * x.dtype.itemsize + O_pad * out_itemsize
    weights_bytes = (w1.size * w1.dtype.itemsize + b1.size * b1.dtype.itemsize +
                     w2.size * w2.dtype.itemsize + b2.size * b2.dtype.itemsize)

    if tile_b is None:
        tile_b = _auto_tile_b(B, row_bytes, weights_bytes)
    tile_b = min(tile_b, B)
    grid = (pl.cdiv(B, tile_b),)        # ragged last block handled by Pallas

    # Weights/biases have constant index maps (VMEM resident across the grid).
    # Once they are big enough that double-buffering them costs real VMEM
    # (matters on v7x's 64 MiB), request single buffering.
    single_buffer_weights = weights_bytes > (8 << 20)

    def _resident_spec(shape):
        if single_buffer_weights:
            return pl.BlockSpec(shape, lambda i: (0, 0),
                                pipeline_mode=pl.Buffered(1))
        return pl.BlockSpec(shape, lambda i: (0, 0))

    # Scoped-VMEM limit sized to actual buffers (v5e default is only 16 MiB).
    vmem_need = (weights_bytes * (1 if single_buffer_weights else 2)
                 + 2 * tile_b * row_bytes)
    vmem_limit = int(min(max(2 * vmem_need, 32 << 20), 64 << 20))

    out = pl.pallas_call(
        decoder_kernel,
        out_shape=jax.ShapeDtypeStruct((B, O_pad), out_dtype),
        grid=grid,
        in_specs=[
            pl.BlockSpec((tile_b, L), lambda i: (i, 0)),   # x tile per step
            _resident_spec((L, H_pad)),                    # W1 resident
            _resident_spec((1, H_pad)),                    # b1 resident
            _resident_spec((H_pad, O_pad)),                # W2 resident
            _resident_spec((1, O_pad)),                    # b2 resident
        ],
        out_specs=pl.BlockSpec((tile_b, O_pad), lambda i: (i, 0)),
        compiler_params=pltpu.CompilerParams(
            dimension_semantics=("parallel",),
            vmem_limit_bytes=vmem_limit),
    )(x, w1, b1, w2, b2)

    if O_pad != O:
        # Only hit when output_dim is not lane-aligned; rows are never padded.
        out = out[:, :O]
    return out


def decoder_reference_f32(x, w_hidden, b_hidden, w_output, b_output):
    h = jnp.maximum(x @ w_hidden.T + b_hidden, 0.0)
    return jax.nn.sigmoid(h @ w_output.T + b_output)


def decoder_reference_bf16(x, w_hidden, b_hidden, w_output, b_output):
    # Precision-matched reference: bf16 MXU operands, f32 accumulation/epilogue.
    xb = x.astype(jnp.bfloat16)
    w1 = jnp.asarray(w_hidden, jnp.float32).T.astype(jnp.bfloat16)
    w2 = jnp.asarray(w_output, jnp.float32).T.astype(jnp.bfloat16)
    h = jnp.dot(xb, w1, preferred_element_type=jnp.float32) + b_hidden
    h = jnp.maximum(h, 0.0).astype(jnp.bfloat16)
    y = jnp.dot(h, w2, preferred_element_type=jnp.float32) + b_output
    return jax.nn.sigmoid(y)


if __name__ == "__main__":
    def run_case(batch, latent_dim, hidden_dim, output_dim, tile_b=None):
        key = jax.random.PRNGKey(0)
        kx, kw1, kb1, kw2, kb2 = jax.random.split(key, 5)

        x = jax.random.normal(kx, (batch, latent_dim), jnp.float32)
        # PyTorch Linear layout: weight (out, in), bias (out,)
        bound1 = 1.0 / (latent_dim ** 0.5)
        w_hidden = jax.random.uniform(kw1, (hidden_dim, latent_dim),
                                      jnp.float32, -bound1, bound1)
        b_hidden = jax.random.uniform(kb1, (hidden_dim,), jnp.float32,
                                      -bound1, bound1)
        bound2 = 1.0 / (hidden_dim ** 0.5)
        w_output = jax.random.uniform(kw2, (output_dim, hidden_dim),
                                      jnp.float32, -bound2, bound2)
        b_output = jax.random.uniform(kb2, (output_dim,), jnp.float32,
                                      -bound2, bound2)

        # One-time param re-layout (would be cached in the model object).
        params = prepare_decoder_params(w_hidden, b_hidden, w_output, b_output)

        out = decoder_forward(x, params, tile_b=tile_b)
        out = jax.block_until_ready(out)
        assert out.shape == (batch, output_dim)

        ref_bf16 = decoder_reference_bf16(x, w_hidden, b_hidden,
                                          w_output, b_output)
        assert jnp.allclose(out, ref_bf16, atol=3e-5, rtol=1e-5), \
            "mismatch vs precision-matched reference"
        ref_f32 = decoder_reference_f32(x, w_hidden, b_hidden,
                                        w_output, b_output)
        assert jnp.allclose(out, ref_f32, atol=5e-2, rtol=5e-2), \
            "mismatch vs f32 reference beyond bf16 tolerance"

    # 1) output_dim not lane-aligned: lane-dense padded stores + column slice.
    run_case(batch=16, latent_dim=8, hidden_dim=32, output_dim=64)
    # 2) output_dim lane-aligned, batch not a multiple of 8: single grid step,
    #    block == full array dims, zero wrapper copies.
    run_case(batch=12, latent_dim=8, hidden_dim=32, output_dim=128)
    # 3) multi-step cdiv grid with a ragged (partial) last batch block.
    run_case(batch=40, latent_dim=8, hidden_dim=32, output_dim=64, tile_b=16)

    print("KERNEL_OK")
</pallas_src>

<mosaic_0001>
module attributes {stable_mosaic.version = 11 : i64} {
  func.func @decoder_kernel(%arg0: i32, %arg1: memref<16x8xf32, #tpu.memory_space<vmem>>, %arg2: memref<8x128xbf16, #tpu.memory_space<vmem>>, %arg3: memref<1x128xf32, #tpu.memory_space<vmem>>, %arg4: memref<128x128xbf16, #tpu.memory_space<vmem>>, %arg5: memref<1x128xf32, #tpu.memory_space<vmem>>, %arg6: memref<16x128xf32, #tpu.memory_space<vmem>>) attributes {dimension_semantics = [#tpu.dimension_semantics<parallel>], iteration_bounds = array<i64: 1>, scalar_prefetch = 0 : i64, scratch_operands = 0 : i64, tpu.core_type = #tpu.core_type<tc>, window_params = [{transform_indices = @transform_0, window_bounds = array<i64: 16, 8>}, {pipeline_mode = #tpu.pipeline_mode<synchronous>, transform_indices = @transform_1, window_bounds = array<i64: 8, 128>}, {pipeline_mode = #tpu.pipeline_mode<synchronous>, transform_indices = @transform_2, window_bounds = array<i64: 1, 128>}, {pipeline_mode = #tpu.pipeline_mode<synchronous>, transform_indices = @transform_3, window_bounds = array<i64: 128, 128>}, {pipeline_mode = #tpu.pipeline_mode<synchronous>, transform_indices = @transform_4, window_bounds = array<i64: 1, 128>}, {transform_indices = @transform_5, window_bounds = array<i64: 16, 128>}]} {
    %c0 = arith.constant 0 : index
    %c0_0 = arith.constant 0 : index
    %0 = vector.load %arg1[%c0, %c0_0] : memref<16x8xf32, #tpu.memory_space<vmem>>, vector<16x8xf32>
    %1 = arith.truncf %0 : vector<16x8xf32> to vector<16x8xbf16>
    %c0_1 = arith.constant 0 : index
    %c0_2 = arith.constant 0 : index
    %2 = vector.load %arg2[%c0_1, %c0_2] : memref<8x128xbf16, #tpu.memory_space<vmem>>, vector<8x128xbf16>
    %cst = arith.constant dense<0.000000e+00> : vector<16x128xf32>
    %3 = tpu.matmul %1, %2, %cst {dimension_numbers = #tpu.dot_dimension_numbers<[1], [0], [0], [1], [0, 0, 1, 1], [], []>} : vector<16x8xbf16>, vector<8x128xbf16>, vector<16x128xf32> -> vector<16x128xf32>
    %c0_3 = arith.constant 0 : index
    %c0_4 = arith.constant 0 : index
    %4 = vector.load %arg3[%c0_3, %c0_4] : memref<1x128xf32, #tpu.memory_space<vmem>>, vector<1x128xf32>
    %5 = vector.broadcast %4 : vector<1x128xf32> to vector<16x128xf32>
    %6 = arith.addf %3, %5 : vector<16x128xf32>
    %cst_5 = arith.constant 0.000000e+00 : f32
    %7 = vector.broadcast %cst_5 : f32 to vector<16x128xf32>
    %8 = arith.maximumf %6, %7 : vector<16x128xf32>
    %9 = arith.truncf %8 : vector<16x128xf32> to vector<16x128xbf16>
    %c0_6 = arith.constant 0 : index
    %c0_7 = arith.constant 0 : index
    %10 = vector.load %arg4[%c0_6, %c0_7] : memref<128x128xbf16, #tpu.memory_space<vmem>>, vector<128x128xbf16>
    %cst_8 = arith.constant dense<0.000000e+00> : vector<16x128xf32>
    %11 = tpu.matmul %9, %10, %cst_8 {dimension_numbers = #tpu.dot_dimension_numbers<[1], [0], [0], [1], [0, 0, 1, 1], [], []>} : vector<16x128xbf16>, vector<128x128xbf16>, vector<16x128xf32> -> vector<16x128xf32>
    %c0_9 = arith.constant 0 : index
    %c0_10 = arith.constant 0 : index
    %12 = vector.load %arg5[%c0_9, %c0_10] : memref<1x128xf32, #tpu.memory_space<vmem>>, vector<1x128xf32>
    %13 = vector.broadcast %12 : vector<1x128xf32> to vector<16x128xf32>
    %14 = arith.addf %11, %13 : vector<16x128xf32>
    %15 = arith.negf %14 : vector<16x128xf32>
    %16 = math.exp %15 : vector<16x128xf32>
    %cst_11 = arith.constant 1.000000e+00 : f32
    %17 = vector.broadcast %cst_11 : f32 to vector<16x128xf32>
    %18 = arith.addf %17, %16 : vector<16x128xf32>
    %19 = arith.divf %17, %18 : vector<16x128xf32>
    %c0_12 = arith.constant 0 : index
    %c0_13 = arith.constant 0 : index
    %20 = vector.load %arg6[%c0_12, %c0_13] : memref<16x128xf32, #tpu.memory_space<vmem>>, vector<16x128xf32>
    tpu.vector_store %arg6[%c0_12, %c0_13], %19 {strides = array<i32>} : memref<16x128xf32, #tpu.memory_space<vmem>>, vector<16x128xf32>,
    return
  }
  func.func @transform_0(%arg0: i32) -> (i32, i32) {
    %c0_i32 = arith.constant 0 : i32
    %c0_i32_0 = arith.constant 0 : i32
    return %arg0, %c0_i32 : i32, i32
  }
  func.func @transform_1(%arg0: i32) -> (i32, i32) {
    %c0_i32 = arith.constant 0 : i32
    %c0_i32_0 = arith.constant 0 : i32
    %c0_i32_1 = arith.constant 0 : i32
    return %c0_i32, %c0_i32_0 : i32, i32
  }
  func.func @transform_2(%arg0: i32) -> (i32, i32) {
    %c0_i32 = arith.constant 0 : i32
    %c0_i32_0 = arith.constant 0 : i32
    %c0_i32_1 = arith.constant 0 : i32
    return %c0_i32, %c0_i32_0 : i32, i32
  }
  func.func @transform_3(%arg0: i32) -> (i32, i32) {
    %c0_i32 = arith.constant 0 : i32
    %c0_i32_0 = arith.constant 0 : i32
    %c0_i32_1 = arith.constant 0 : i32
    return %c0_i32, %c0_i32_0 : i32, i32
  }
  func.func @transform_4(%arg0: i32) -> (i32, i32) {
    %c0_i32 = arith.constant 0 : i32
    %c0_i32_0 = arith.constant 0 : i32
    %c0_i32_1 = arith.constant 0 : i32
    return %c0_i32, %c0_i32_0 : i32, i32
  }
  func.func @transform_5(%arg0: i32) -> (i32, i32) {
    %c0_i32 = arith.constant 0 : i32
    %c0_i32_0 = arith.constant 0 : i32
    return %arg0, %c0_i32 : i32, i32
  }
}

</mosaic_0001>

<llo_original>
// kernel: tpu_custom_call.1
$region0: #{tpu_custom_call.1}
  #allocation0 [shape = 'u32[]', space=smem, size = 0x4, offset = 0x4, fixed_abs, tag = 'smem constant byte address 0x4 - core index']
  #allocation1 [shape = 'u32[144,128]{1,0:T(1,128)}', space=vmem, size = 0x12000, scoped, tag = 'internal scratch']
  %s0 = inlined_call_operand.vmem [shape: f32[16,8], index: 0, kind: input, shape index: {}]
  %s1 = inlined_call_operand.vmem [shape: bf16[8,128], index: 1, kind: input, shape index: {}]
  %s2 = inlined_call_operand.vmem [shape: f32[1,128], index: 2, kind: input, shape index: {}]
  %s3 = inlined_call_operand.hbm [shape: bf16[128,128], index: 3, kind: input, shape index: {}]
  %s4 = inlined_call_operand.vmem [shape: f32[1,128], index: 4, kind: input, shape index: {}]
  %s5 = inlined_call_operand.hbm [shape: f32[16,128], index: 5, kind: output, shape index: {}]
  %s6 = sld [smem:[#allocation0]]
  $region34: #{tpu_custom_call.1} parent=0
    _
  %s8 = ssub.s32 1, %s6
  %s9 = scalar_select 0, %s8, %s6
  $region1: #{tpu_custom_call.1} parent=0
    #allocation2 [shape = 'u8[32768]{0}', space=vmem, size = 0x8000, scoped, tag = 'input window, operand 3, single buffered']
    #allocation3 [shape = 's32[1]{0}', space=sflag, size = 0x4, scoped, tag = 'scoped memory for tpu_custom_call.1']
    #allocation4 [shape = 's32[1]{0}', space=sflag, size = 0x4, scoped, tag = 'scoped memory for tpu_custom_call.1']
    #allocation5 [shape = 'u8[8192]{0}', space=vmem, size = 0x2000, scoped, tag = 'output window, operand 0, single buffered']
    %10 = vsyncpa [#allocation3], 0
    %11 = vsyncpa [#allocation4], 0
    // Predicated region
    $region2: #{tpu_custom_call.1} parent=1 // pred_check
      _
    $region3: #{tpu_custom_call.1} parent=1 // pred_check_branch
      %13 = sbr.rel (0) target = $region5
    $region4: #{tpu_custom_call.1} parent=1 // pred_region
      _
    $region5: #{tpu_custom_call.1} parent=1 // pred_fallthru
      _
    // Predicated region
    $region6: #{tpu_custom_call.1} parent=1 // pred_check
      _
    $region7: #{tpu_custom_call.1} parent=1 // pred_check_branch
      %15 = sbr.rel (0) target = $region9
    $region8: #{tpu_custom_call.1} parent=1 // pred_region
      _
    $region9: #{tpu_custom_call.1} parent=1 // pred_fallthru
      _
    // Predicated region
    $region10: #{tpu_custom_call.1} parent=1 // pred_check
      _
    $region11: #{tpu_custom_call.1} parent=1 // pred_check_branch
      %17 = sbr.rel (0) target = $region13
    $region12: #{tpu_custom_call.1} parent=1 // pred_region
      _
    $region13: #{tpu_custom_call.1} parent=1 // pred_fallthru
      _
    // Predicated region
    $region14: #{tpu_custom_call.1} parent=1 // pred_check
      _
    $region15: #{tpu_custom_call.1} parent=1 // pred_check_branch
      %19 = sbr.rel (0) target = $region17
    $region16: #{tpu_custom_call.1} parent=1 // pred_region
      %s21 = ssub.s32 1024, 1024
      %22 = vsyncadd [#allocation3], %s21
      %s23 = sshll.u32 [#allocation2], 4
      %s24 = int_to_ptr.vmem [resolvable:$true] %s23
      %29 = dma.hbm_to_vmem [thread:$0]  %s3, 1024, %s24, [#allocation3], 64, 64, 4
    $region17: #{tpu_custom_call.1} parent=1 // pred_fallthru
      _
    // Predicated region
    $region18: #{tpu_custom_call.1} parent=1 // pred_check
      _
    $region19: #{tpu_custom_call.1} parent=1 // pred_check_branch
      %31 = sbr.rel (0) target = $region21
    $region20: #{tpu_custom_call.1} parent=1 // pred_region
      _
    $region21: #{tpu_custom_call.1} parent=1 // pred_fallthru
      _
    // Predicated region
    $region22: #{tpu_custom_call.1} parent=1 // pred_check
      _
    $region23: #{tpu_custom_call.1} parent=1 // pred_check_branch
      %33 = sbr.rel (0) target = $region25
    $region24: #{tpu_custom_call.1} parent=1 // pred_region
      %34 = dma.done [#allocation3], 1024
    $region25: #{tpu_custom_call.1} parent=1 // pred_fallthru
      _
    %v36 = vld [vmem:[%s0] sm:$0xff]
    %v37 = vld [vmem:[%s0 + $0x8] sm:$0xff]
    %v38 = vpack.c.bf16 %v37, %v36
    %v39 = vld [vmem:[%s1] sm:$0xf]
    %v40 = vld [vmem:[%s2] sm:$0x1]
    %v42 = vlaneseq
    %v43 = vshrl.u32 %v42, 7
    %v44 = vsub.s32 0, %v43
    %v45 = vrot.slane %v40, %v44
    %vm47 = vcmask 64512
    %v49 = vsel %vm47, %v38, 0
    %vm51 = vcmask 1043456
    %v53 = vsel %vm51, %v39, 0
    %55 = vmatprep.subr.bf16.mxu0 0
    %56 = vmatpush1.bf16.msra.mxu0 %v53
    %57 = vmatprep.subr.bf16.mxu0 0
    %58 = vmatpush1.bf16.msra.mxu0 0
    %59 = vmatprep.subr.bf16.mxu0 0
    %60 = vmatpush1.bf16.msra.mxu0 0
    %61 = vmatprep.subr.bf16.mxu0 0
    %62 = vmatpush1.bf16.msra.mxu0 0
    %63 = vmatprep.subr.bf16.mxu0 0
    %64 = vmatpush1.bf16.msra.mxu0 0
    %65 = vmatprep.subr.bf16.mxu0 0
    %66 = vmatpush1.bf16.msra.mxu0 0
    %67 = vmatprep.subr.bf16.mxu0 0
    %68 = vmatpush1.bf16.msra.mxu0 0
    %69 = vmatprep.subr.bf16.mxu0 0
    %70 = vmatpush1.bf16.msra.mxu0 0
    %71 = vmatprep.subr.bf16.mxu0 0
    %72 = vmatpush1.bf16.msra.mxu0 0
    %73 = vmatprep.subr.bf16.mxu0 0
    %74 = vmatpush1.bf16.msra.mxu0 0
    %75 = vmatprep.subr.bf16.mxu0 0
    %76 = vmatpush1.bf16.msra.mxu0 0
    %77 = vmatprep.subr.bf16.mxu0 0
    %78 = vmatpush1.bf16.msra.mxu0 0
    %79 = vmatprep.subr.bf16.mxu0 0
    %80 = vmatpush1.bf16.msra.mxu0 0
    %81 = vmatprep.subr.bf16.mxu0 0
    %82 = vmatpush1.bf16.msra.mxu0 0
    %83 = vmatprep.subr.bf16.mxu0 0
    %84 = vmatpush1.bf16.msra.mxu0 0
    %85 = vmatprep.subr.bf16.mxu0 0
    %86 = vmatpush1.bf16.msra.mxu0 0
    %87 = vmatprep.mubr.bf16.mxu0 0
    %88 = vmatmul.mubr.bf16.gmra.mrb[0].mxu0 %v49
    %v89 = vpop.f32.mrb[0].mxu0
    %v90 = vadd.f32 %v45, %v89
    %v91 = vpop.f32.mrb[0].mxu0
    %v92 = vpop.f32.mrb[0].mxu0
    %v93 = vadd.f32 %v45, %v92
    %v94 = vpop.f32.mrb[0].mxu0
    %95 = vdwg.mxu0
    %v96 = vmax.f32 %v90, 0.0
    %v97 = vmax.f32 %v93, 0.0
    %v98 = vpack.c.bf16 %v97, %v96
    %v99 = vld [vmem:[#allocation2] sm:$0xf]
    %v100 = vld [vmem:[#allocation2 + $0x4] sm:$0xf]
    %v101 = vld [vmem:[#allocation2 + $0x8] sm:$0xf]
    %v102 = vld [vmem:[#allocation2 + $0xc] sm:$0xf]
    %v103 = vld [vmem:[#allocation2 + $0x10] sm:$0xf]
    %v104 = vld [vmem:[#allocation2 + $0x14] sm:$0xf]
    %v105 = vld [vmem:[#allocation2 + $0x18] sm:$0xf]
    %v106 = vld [vmem:[#allocation2 + $0x1c] sm:$0xf]
    %v107 = vld [vmem:[#allocation2 + $0x20] sm:$0xf]
    %v108 = vld [vmem:[#allocation2 + $0x24] sm:$0xf]
    %v109 = vld [vmem:[#allocation2 + $0x28] sm:$0xf]
    %v110 = vld [vmem:[#allocation2 + $0x2c] sm:$0xf]
    %v111 = vld [vmem:[#allocation2 + $0x30] sm:$0xf]
    %v112 = vld [vmem:[#allocation2 + $0x34] sm:$0xf]
    %v113 = vld [vmem:[#allocation2 + $0x38] sm:$0xf]
    %v114 = vld [vmem:[#allocation2 + $0x3c] sm:$0xf]
    %v115 = vld [vmem:[%s4] sm:$0x1]
    %v117 = vlaneseq
    %v118 = vshrl.u32 %v117, 7
    %v119 = vsub.s32 0, %v118
    %v120 = vrot.slane %v115, %v119
    %v138 = vunpack.c.l.b16 %v99
    %v139 = vunpack.c.l.b16 %v100
    %v140 = vunpack.c.l.b16 %v101
    %v141 = vunpack.c.l.b16 %v102
    %v142 = vunpack.c.l.b16 %v103
    %v143 = vunpack.c.l.b16 %v104
    %v144 = vunpack.c.l.b16 %v105
    %v145 = vunpack.c.l.b16 %v106
    %v146 = vunpack.c.l.b16 %v107
    %v147 = vunpack.c.l.b16 %v108
    %v148 = vunpack.c.l.b16 %v109
    %v149 = vunpack.c.l.b16 %v110
    %v150 = vunpack.c.l.b16 %v111
    %v151 = vunpack.c.l.b16 %v112
    %v152 = vunpack.c.l.b16 %v113
    %v153 = vunpack.c.l.b16 %v114
    %v154 = vpack.c.b16 %v139, %v138
    %v155 = vpack.c.b16 %v141, %v140
    %v156 = vpack.c.b16 %v143, %v142
    %v157 = vpack.c.b16 %v145, %v144
    %v158 = vpack.c.b16 %v147, %v146
    %v159 = vpack.c.b16 %v149, %v148
    %v160 = vpack.c.b16 %v151, %v150
    %v161 = vpack.c.b16 %v153, %v152
    %170 = vmatprep.subr.bf16.mxu0 0
    %171 = vmatpush1.bf16.msra.mxu0 %v154
    %172 = vmatprep.subr.bf16.mxu0 0
    %173 = vmatpush1.bf16.msra.mxu0 %v155
    %174 = vmatprep.subr.bf16.mxu0 0
    %175 = vmatpush1.bf16.msra.mxu0 %v156
    %176 = vmatprep.subr.bf16.mxu0 0
    %177 = vmatpush1.bf16.msra.mxu0 %v157
    %178 = vmatprep.subr.bf16.mxu0 0
    %179 = vmatpush1.bf16.msra.mxu0 %v158
    %180 = vmatprep.subr.bf16.mxu0 0
    %181 = vmatpush1.bf16.msra.mxu0 %v159
    %182 = vmatprep.subr.bf16.mxu0 0
    %183 = vmatpush1.bf16.msra.mxu0 %v160
    %184 = vmatprep.subr.bf16.mxu0 0
    %185 = vmatpush1.bf16.msra.mxu0 %v161
    %186 = vmatprep.subr.bf16.mxu0 0
    %187 = vmatpush1.bf16.msra.mxu0 0
    %188 = vmatprep.subr.bf16.mxu0 0
    %189 = vmatpush1.bf16.msra.mxu0 0
    %190 = vmatprep.subr.bf16.mxu0 0
    %191 = vmatpush1.bf16.msra.mxu0 0
    %192 = vmatprep.subr.bf16.mxu0 0
    %193 = vmatpush1.bf16.msra.mxu0 0
    %194 = vmatprep.subr.bf16.mxu0 0
    %195 = vmatpush1.bf16.msra.mxu0 0
    %196 = vmatprep.subr.bf16.mxu0 0
    %197 = vmatpush1.bf16.msra.mxu0 0
    %198 = vmatprep.subr.bf16.mxu0 0
    %199 = vmatpush1.bf16.msra.mxu0 0
    %200 = vmatprep.subr.bf16.mxu0 0
    %201 = vmatpush1.bf16.msra.mxu0 0
    %202 = vmatprep.mubr.bf16.mxu0 0
    %203 = vmatmul.mubr.bf16.gmra.mrb[0].mxu0 %v98
    %v204 = vpop.f32.mrb[0].mxu0
    %v205 = vadd.f32 %v120, %v204
    %v206 = vpop.f32.mrb[0].mxu0
    %v207 = vpop.f32.mrb[0].mxu0
    %v208 = vadd.f32 %v120, %v207
    %v209 = vpop.f32.mrb[0].mxu0
    %210 = vdwg.mxu0
    %v211 = vxor.u32 %v205, 2147483648
    %v212 = vxor.u32 %v208, 2147483648
    %v213 = vmul.f32 %v211, 1.442695
    %v214 = vpow.pop %v213
    %v215 = vmul.f32 %v212, 1.442695
    %v216 = vpow.pop %v215
    %v217 = vadd.f32 %v214, 1.0
    %v218 = vadd.f32 %v216, 1.0
    %v219 = vrcp.pop %v217
    %v220 = vmul.f32 1.0, %v219
    %v221 = vrcp.pop %v218
    %v222 = vmul.f32 1.0, %v221
    %223 = vst [vmem:[#allocation5] sm:$0xff] %v220
    %224 = vst [vmem:[#allocation5 + $0x8] sm:$0xff] %v222
    // Predicated region
    $region26: #{tpu_custom_call.1} parent=1 // pred_check
      _
    $region27: #{tpu_custom_call.1} parent=1 // pred_check_branch
      %226 = sbr.rel (0) target = $region29
    $region28: #{tpu_custom_call.1} parent=1 // pred_region
      %s228 = ssub.s32 256, 256
      %229 = vsyncadd [#allocation4], %s228
      %s230 = sshll.u32 [#allocation5], 4
      %s231 = int_to_ptr.vmem [resolvable:$true] %s230
      %236 = dma.vmem_to_hbm [thread:$0]  %s231, 256, %s5, [#allocation4], 128, 128, 8
    $region29: #{tpu_custom_call.1} parent=1 // pred_fallthru
      _
    // Predicated region
    $region30: #{tpu_custom_call.1} parent=1 // pred_check
      _
    $region31: #{tpu_custom_call.1} parent=1 // pred_check_branch
      %238 = sbr.rel (0) target = $region33
    $region32: #{tpu_custom_call.1} parent=1 // pred_region
      %239 = dma.done [#allocation4], 256
    $region33: #{tpu_custom_call.1} parent=1 // pred_fallthru
      _
    %240 = vsyncpa [#allocation3], 1
    %241 = vsyncpa [#allocation4], 1

</llo_original>
